<compile_context>
chip_gen: v7x
topology: tpu7x:2x2x1
jax: 0.10.0
libtpu: 0.0.40
codegen_flags: <defaults>
</compile_context>

<pallas_src>
import functools

import jax
import jax.numpy as jnp
from jax.experimental import pallas as pl
from jax.experimental.pallas import tpu as pltpu

_MIB = 1024 * 1024


# --------------------------------------------------------------------------
# Kernels
# --------------------------------------------------------------------------
def _finish_activation(y_f32, activation, out_dtype):
    """Apply activation_factory's activation and cast to the output dtype."""
    if activation == "RELU":
        return jnp.maximum(y_f32, 0.0).astype(out_dtype)
    if activation == "TANH":
        if jnp.dtype(out_dtype) == jnp.dtype(jnp.bfloat16):
            # v6e/v7x EUP evaluates tanh natively at bf16 (half the EUP work);
            # relevant on v7x where 3.2 TB/s HBM can make TANH EUP-bound.
            # Mosaic widens on v5e, so this stays legal everywhere.
            return jnp.tanh(y_f32.astype(jnp.bfloat16)).astype(out_dtype)
        return jnp.tanh(y_f32).astype(out_dtype)
    if activation is None:
        return y_f32.astype(out_dtype)
    raise ValueError(f"Unknown activation_type: {activation}")


def _norm_act_kernel(x_ref, p_ref, o_ref, *, activation):
    # x_ref: (TN, TL) input dtype; p_ref: (2, TL) f32 packed [mean; inv_std].
    x = x_ref[...].astype(jnp.float32)          # torch: input.float()
    mean = p_ref[0:1, :]                        # (1, TL) -> sublane broadcast
    inv_std = p_ref[1:2, :]
    y = (x - mean) * inv_std                    # exact 1/std precomputed (f32)
    o_ref[...] = _finish_activation(y, activation, o_ref.dtype)


def _act_kernel(x_ref, o_ref, *, activation):
    y = x_ref[...].astype(jnp.float32)
    o_ref[...] = _finish_activation(y, activation, o_ref.dtype)


# --------------------------------------------------------------------------
# Tiling / VMEM policy
# --------------------------------------------------------------------------
def _round_down(v, m):
    return (v // m) * m


def _round_up(v, m):
    return ((v + m - 1) // m) * m


def _vmem_limit_and_budget():
    """Generation-aware scoped-VMEM limit and per-step working-set budget."""
    try:
        cap = int(pltpu.get_tpu_info().vmem_capacity_bytes)
    except Exception:
        cap = 64 * _MIB  # conservative fallback (v7x-class per-TC VMEM)
    if cap <= 80 * _MIB:
        # v7x-class (64 MiB physical per TC): large tiles amortize the
        # ~0.35 us per-grid-step overhead against 3.2 TB/s HBM.
        vmem_limit = 44 * _MIB
    else:
        # v5e / v6e (128 MiB physical): explicit limit above v5e's 16 MiB
        # scoped default so double-buffered in+out always fits.
        vmem_limit = 32 * _MIB
    budget = vmem_limit // 2  # target working set; leaves compiler headroom
    return vmem_limit, budget


def _select_tiles(n_rows, n_lanes, in_item, out_item, budget, normalize):
    """Pick (TN, TL) for a (n_rows, n_lanes) elementwise pass.

    TPU legality: TN % 8 == 0 or TN == n_rows; TL % 128 == 0 or TL == n_lanes
    (the wrapper guarantees n_lanes % 128 == 0).  Budget covers double-
    buffered in + out tiles plus the (sublane-padded) packed param blocks.
    """
    data_per_elem = 2 * (in_item + out_item)            # 2 buffers x (in+out)
    param_per_lane = (2 * 8 * 4) if normalize else 0    # (2,TL) f32, 8-subl pad

    # Case 1: full lane extent, tile rows.
    per_row = n_lanes * data_per_elem
    fixed = n_lanes * param_per_lane
    if fixed < budget:
        tn_cap = (budget - fixed) // per_row
        if tn_cap >= n_rows:
            return n_rows, n_lanes
        if tn_cap >= 8:
            return _round_down(tn_cap, 8), n_lanes

    # Case 2: rows are too wide -> tile the lane axis as well.
    tn = n_rows if n_rows < 8 else 8
    per_lane = tn * data_per_elem + param_per_lane
    tl_cap = max(128, budget // max(1, per_lane))
    tl = min(n_lanes, max(128, _round_down(tl_cap, 128)))
    return tn, tl


def _ensure_two_tiles(tn, tl, n_rows, n_lanes, total_bytes):
    """v7x has 2 TensorCores; 'parallel' only helps with >= 2 grid steps."""
    if total_bytes < 1 * _MIB:
        return tn, tl  # overhead-dominated; splitting would only add steps
    if pl.cdiv(n_rows, tn) * pl.cdiv(n_lanes, tl) >= 2:
        return tn, tl
    half_rows = _round_up(pl.cdiv(n_rows, 2), 8)
    if half_rows < n_rows:
        return half_rows, tl
    half_lanes = _round_up(pl.cdiv(n_lanes, 2), 128)
    if half_lanes < n_lanes:
        return tn, half_lanes
    return tn, tl


# --------------------------------------------------------------------------
# Wrapper (BaseModule.forward hot path)
# --------------------------------------------------------------------------
def base_module_forward(x_nchw, mean_c=None, std_c=None, *,
                        activation_type="RELU", normalize=True,
                        out_dtype=None):
    """Pallas implementation of BaseModule's normalization + activation.

    x_nchw : (N, C, H, W) array (NCHW, as in PyTorch), any float dtype
    mean_c : (C,) per-channel mean   (required if normalize=True)
    std_c  : (C,) per-channel std    (required if normalize=True)
    out_dtype: defaults to the input dtype (bandwidth-friendly; torch's
               .float() would yield f32 — pass out_dtype=jnp.float32 for that).
    """
    N, C, H, W = x_nchw.shape
    L = H * W
    M = C * L
    if out_dtype is None:
        out_dtype = x_nchw.dtype

    # Fold to a lane-dense 2-D slab: rows = batch, lanes = C*H*W (contiguous
    # in NCHW memory order).  Per-channel params become per-lane rows.
    x2d = x_nchw.reshape(N, M)

    # Lane-axis padding so output stores are unmasked (only when needed).
    Mp = max(128, _round_up(M, 128))
    pad = Mp - M
    if pad:
        # TODO(synk): for a standalone pass the pad/slice copies cost extra
        # HBM traffic; fuse into the consumer to avoid them entirely.
        x2d = jnp.pad(x2d, ((0, 0), (0, pad)))

    in_item = jnp.dtype(x_nchw.dtype).itemsize
    out_item = jnp.dtype(out_dtype).itemsize

    vmem_limit, budget = _vmem_limit_and_budget()
    tn, tl = _select_tiles(N, Mp, in_item, out_item, budget, normalize)
    tn, tl = _ensure_two_tiles(tn, tl, N, Mp, N * Mp * (in_item + out_item))
    grid = (pl.cdiv(N, tn), pl.cdiv(Mp, tl))
    cparams = pltpu.CompilerParams(
        dimension_semantics=("parallel", "parallel"),
        vmem_limit_bytes=vmem_limit)

    if normalize:
        if mean_c is None or std_c is None:
            raise ValueError("normalize=True requires mean_c and std_c")
        mean_f = mean_c.astype(jnp.float32)
        # set_normalization_params: std[std == 0.0] = 1.0
        std_safe = jnp.where(std_c == 0.0, 1.0, std_c).astype(jnp.float32)
        inv_std = 1.0 / std_safe
        # Tiny packed (2, Mp) f32 [mean; 1/std] per-lane rows: per-step block
        # is (2, TL) — independent of the row tile, one small DMA stream.
        mean_lane = jnp.broadcast_to(mean_f[:, None], (C, L)).reshape(1, M)
        inv_lane = jnp.broadcast_to(inv_std[:, None], (C, L)).reshape(1, M)
        params = jnp.concatenate([mean_lane, inv_lane], axis=0)
        if pad:
            params = jnp.pad(params, ((0, 0), (0, pad)))

        kernel = functools.partial(_norm_act_kernel, activation=activation_type)
        out2d = pl.pallas_call(
            kernel,
            out_shape=jax.ShapeDtypeStruct((N, Mp), out_dtype),
            grid=grid,
            in_specs=[pl.BlockSpec((tn, tl), lambda i, j: (i, j)),
                      pl.BlockSpec((2, tl), lambda i, j: (0, j))],
            out_specs=pl.BlockSpec((tn, tl), lambda i, j: (i, j)),
            compiler_params=cparams,
        )(x2d, params)
    else:
        # normalize=False: skip the dead normalization traffic entirely.
        kernel = functools.partial(_act_kernel, activation=activation_type)
        out2d = pl.pallas_call(
            kernel,
            out_shape=jax.ShapeDtypeStruct((N, Mp), out_dtype),
            grid=grid,
            in_specs=[pl.BlockSpec((tn, tl), lambda i, j: (i, j))],
            out_specs=pl.BlockSpec((tn, tl), lambda i, j: (i, j)),
            compiler_params=cparams,
        )(x2d)

    if pad:
        out2d = out2d[:, :M]
    return out2d.reshape(N, C, H, W)


# --------------------------------------------------------------------------
# Reference + self-test
# --------------------------------------------------------------------------
def _reference(x, mean_c, std_c, activation_type="RELU"):
    x = x.astype(jnp.float32)
    std_safe = jnp.where(std_c == 0.0, 1.0, std_c).astype(jnp.float32)
    y = (x - mean_c.astype(jnp.float32)[None, :, None, None]) \
        / std_safe[None, :, None, None]
    if activation_type == "RELU":
        return jnp.maximum(y, 0.0)
    return jnp.tanh(y)


if __name__ == "__main__":
    key = jax.random.PRNGKey(0)
    kx, km, ks = jax.random.split(key, 3)

    N, C, H, W = 2, 4, 16, 16
    x = jax.random.normal(kx, (N, C, H, W), dtype=jnp.float32)
    mean_c = jax.random.normal(km, (C,), dtype=jnp.float32) * 0.5
    std_c = jnp.abs(jax.random.normal(ks, (C,), dtype=jnp.float32)) + 0.5
    std_c = std_c.at[1].set(0.0)   # exercise std==0 -> 1.0 path

    # f32 normalize + RELU (bit-comparable to the reference)
    out = jax.block_until_ready(
        base_module_forward(x, mean_c, std_c, activation_type="RELU"))
    ref = _reference(x, mean_c, std_c, "RELU")
    assert out.shape == (N, C, H, W) and out.dtype == jnp.float32
    assert jnp.allclose(out, ref, atol=1e-5, rtol=1e-5), "f32 mismatch vs ref"

    # bf16 dtype-preserving path (in bf16, out bf16, f32 math in-kernel)
    out_bf16 = jax.block_until_ready(base_module_forward(
        x.astype(jnp.bfloat16), mean_c, std_c, activation_type="RELU"))
    assert out_bf16.dtype == jnp.bfloat16
    assert jnp.allclose(out_bf16.astype(jnp.float32), ref,
                        atol=3e-2, rtol=3e-2), "bf16 RELU mismatch vs ref"

    # bf16 TANH (exercises the low-precision EUP tanh branch)
    out_t = jax.block_until_ready(base_module_forward(
        x.astype(jnp.bfloat16), mean_c, std_c, activation_type="TANH"))
    ref_t = _reference(x, mean_c, std_c, "TANH")
    assert jnp.allclose(out_t.astype(jnp.float32), ref_t,
                        atol=3e-2, rtol=3e-2), "bf16 TANH mismatch vs ref"

    # C*H*W not a multiple of 128 -> lane-padding path
    x_odd = jax.random.normal(kx, (2, 3, 10, 10), dtype=jnp.float32)
    m3 = jnp.arange(3, dtype=jnp.float32) * 0.1
    s3 = jnp.full((3,), 0.7, jnp.float32)
    out_odd = jax.block_until_ready(
        base_module_forward(x_odd, m3, s3, activation_type="RELU"))
    assert jnp.allclose(out_odd, _reference(x_odd, m3, s3, "RELU"),
                        atol=1e-5, rtol=1e-5), "padded-lane mismatch vs ref"

    # normalize=False: activation only (skips normalization traffic)
    out_act = jax.block_until_ready(
        base_module_forward(x, activation_type="TANH", normalize=False))
    assert jnp.allclose(out_act, jnp.tanh(x), atol=1e-5, rtol=1e-5)

    print("KERNEL_OK")
</pallas_src>

<mosaic_0001>
module attributes {stable_mosaic.version = 11 : i64} {
  func.func @_norm_act_kernel(%arg0: i32, %arg1: i32, %arg2: memref<2x1024xf32, #tpu.memory_space<vmem>>, %arg3: memref<2x1024xf32, #tpu.memory_space<vmem>>, %arg4: memref<2x1024xf32, #tpu.memory_space<vmem>>) attributes {dimension_semantics = [#tpu.dimension_semantics<parallel>, #tpu.dimension_semantics<parallel>], iteration_bounds = array<i64: 1, 1>, scalar_prefetch = 0 : i64, scratch_operands = 0 : i64, tpu.core_type = #tpu.core_type<tc>, window_params = [{transform_indices = @transform_0, window_bounds = array<i64: 2, 1024>}, {transform_indices = @transform_1, window_bounds = array<i64: 2, 1024>}, {transform_indices = @transform_2, window_bounds = array<i64: 2, 1024>}]} {
    %c0 = arith.constant 0 : index
    %c0_0 = arith.constant 0 : index
    %0 = vector.load %arg2[%c0, %c0_0] : memref<2x1024xf32, #tpu.memory_space<vmem>>, vector<2x1024xf32>
    %c0_1 = arith.constant 0 : index
    %c0_2 = arith.constant 0 : index
    %1 = vector.load %arg3[%c0_1, %c0_2] : memref<2x1024xf32, #tpu.memory_space<vmem>>, vector<1x1024xf32>
    %c1 = arith.constant 1 : index
    %c0_3 = arith.constant 0 : index
    %2 = vector.load %arg3[%c1, %c0_3] : memref<2x1024xf32, #tpu.memory_space<vmem>>, vector<1x1024xf32>
    %3 = vector.broadcast %1 : vector<1x1024xf32> to vector<2x1024xf32>
    %4 = arith.subf %0, %3 : vector<2x1024xf32>
    %5 = vector.broadcast %2 : vector<1x1024xf32> to vector<2x1024xf32>
    %6 = arith.mulf %4, %5 : vector<2x1024xf32>
    %cst = arith.constant 0.000000e+00 : f32
    %7 = vector.broadcast %cst : f32 to vector<2x1024xf32>
    %8 = arith.maximumf %6, %7 : vector<2x1024xf32>
    %c0_4 = arith.constant 0 : index
    %c0_5 = arith.constant 0 : index
    %9 = vector.load %arg4[%c0_4, %c0_5] : memref<2x1024xf32, #tpu.memory_space<vmem>>, vector<2x1024xf32>
    tpu.vector_store %arg4[%c0_4, %c0_5], %8 {strides = array<i32>} : memref<2x1024xf32, #tpu.memory_space<vmem>>, vector<2x1024xf32>,
    return
  }
  func.func @transform_0(%arg0: i32, %arg1: i32) -> (i32, i32) {
    %c0_i32 = arith.constant 0 : i32
    return %arg0, %arg1 : i32, i32
  }
  func.func @transform_1(%arg0: i32, %arg1: i32) -> (i32, i32) {
    %c0_i32 = arith.constant 0 : i32
    %c0_i32_0 = arith.constant 0 : i32
    return %c0_i32, %arg1 : i32, i32
  }
  func.func @transform_2(%arg0: i32, %arg1: i32) -> (i32, i32) {
    %c0_i32 = arith.constant 0 : i32
    return %arg0, %arg1 : i32, i32
  }
}

</mosaic_0001>

<llo_original>
// kernel: tpu_custom_call.1
$region0: #{tpu_custom_call.1}
  #allocation0 [shape = 'u32[]', space=smem, size = 0x4, offset = 0x4, fixed_abs, tag = 'smem constant byte address 0x4 - core index']
  #allocation1 [shape = 'u32[144,128]{1,0:T(1,128)}', space=vmem, size = 0x12000, scoped, tag = 'internal scratch']
  %s0 = inlined_call_operand.hbm [shape: f32[2,1024], index: 0, kind: input, shape index: {}]
  %s1 = inlined_call_operand.hbm [shape: f32[2,1024], index: 1, kind: input, shape index: {}]
  %s2 = inlined_call_operand.hbm [shape: f32[2,1024], index: 2, kind: output, shape index: {}]
  %s3 = sld [smem:[#allocation0]]
  $region26: #{tpu_custom_call.1} parent=0
    _
  %s5 = ssub.s32 1, %s3
  %s6 = scalar_select 0, %s5, %s3
  $region1: #{tpu_custom_call.1} parent=0
    #allocation2 [shape = 'u8[8192]{0}', space=vmem, size = 0x2000, scoped, tag = 'input window, operand 0, single buffered']
    #allocation3 [shape = 's32[1]{0}', space=sflag, size = 0x4, scoped, tag = 'scoped memory for tpu_custom_call.1']
    #allocation4 [shape = 's32[1]{0}', space=sflag, size = 0x4, scoped, tag = 'scoped memory for tpu_custom_call.1']
    #allocation5 [shape = 'u8[8192]{0}', space=vmem, size = 0x2000, scoped, tag = 'input window, operand 1, single buffered']
    #allocation6 [shape = 's32[1]{0}', space=sflag, size = 0x4, scoped, tag = 'scoped memory for tpu_custom_call.1']
    #allocation7 [shape = 'u8[8192]{0}', space=vmem, size = 0x2000, scoped, tag = 'output window, operand 0, single buffered']
    %7 = vsyncpa [#allocation3], 0
    %8 = vsyncpa [#allocation6], 0
    %9 = vsyncpa [#allocation4], 0
    // Predicated region
    $region2: #{tpu_custom_call.1} parent=1 // pred_check
      _
    $region3: #{tpu_custom_call.1} parent=1 // pred_check_branch
      %11 = sbr.rel (0) target = $region5
    $region4: #{tpu_custom_call.1} parent=1 // pred_region
      %s13 = ssub.s32 256, 256
      %14 = vsyncadd [#allocation3], %s13
      %s16 = sshll.u32 [#allocation2], 4
      %s17 = int_to_ptr.vmem [resolvable:$true] %s16
      %19 = dma.hbm_to_vmem [thread:$0]  %s0, 256, %s17, [#allocation3]
    $region5: #{tpu_custom_call.1} parent=1 // pred_fallthru
      _
    // Predicated region
    $region6: #{tpu_custom_call.1} parent=1 // pred_check
      _
    $region7: #{tpu_custom_call.1} parent=1 // pred_check_branch
      %21 = sbr.rel (0) target = $region9
    $region8: #{tpu_custom_call.1} parent=1 // pred_region
      %s23 = ssub.s32 256, 256
      %24 = vsyncadd [#allocation6], %s23
      %s26 = sshll.u32 [#allocation5], 4
      %s27 = int_to_ptr.vmem [resolvable:$true] %s26
      %29 = dma.hbm_to_vmem [thread:$0]  %s1, 256, %s27, [#allocation6]
    $region9: #{tpu_custom_call.1} parent=1 // pred_fallthru
      _
    // Predicated region
    $region10: #{tpu_custom_call.1} parent=1 // pred_check
      _
    $region11: #{tpu_custom_call.1} parent=1 // pred_check_branch
      %31 = sbr.rel (0) target = $region13
    $region12: #{tpu_custom_call.1} parent=1 // pred_region
      %32 = dma.done [#allocation3], 256
    $region13: #{tpu_custom_call.1} parent=1 // pred_fallthru
      _
    // Predicated region
    $region14: #{tpu_custom_call.1} parent=1 // pred_check
      _
    $region15: #{tpu_custom_call.1} parent=1 // pred_check_branch
      %34 = sbr.rel (0) target = $region17
    $region16: #{tpu_custom_call.1} parent=1 // pred_region
      %35 = dma.done [#allocation6], 256
    $region17: #{tpu_custom_call.1} parent=1 // pred_fallthru
      _
    %v36 = vld [vmem:[#allocation2] sm:$0xff]
    %v37 = vld [vmem:[#allocation2 + $0x8] sm:$0xff]
    %v38 = vld [vmem:[#allocation5] ss:$2 sm:$0xff]
    %s39 = scalar_lea.vmem [#allocation5], 1
    %v40 = vld [vmem:[%s39] ss:$2 sm:$0xff]
    %v42 = vlaneseq
    %v43 = vshrl.u32 %v42, 7
    %v44 = vsub.s32 0, %v43
    %v45 = vrot.slane %v38, %v44
    %v46 = vlaneseq
    %v47 = vshrl.u32 %v46, 7
    %v48 = vsub.s32 1, %v47
    %v49 = vrot.slane %v38, %v48
    %v50 = vlaneseq
    %v51 = vshrl.u32 %v50, 7
    %v52 = vsub.s32 2, %v51
    %v53 = vrot.slane %v38, %v52
    %v54 = vlaneseq
    %v55 = vshrl.u32 %v54, 7
    %v56 = vsub.s32 3, %v55
    %v57 = vrot.slane %v38, %v56
    %v58 = vlaneseq
    %v59 = vshrl.u32 %v58, 7
    %v60 = vsub.s32 4, %v59
    %v61 = vrot.slane %v38, %v60
    %v62 = vlaneseq
    %v63 = vshrl.u32 %v62, 7
    %v64 = vsub.s32 5, %v63
    %v65 = vrot.slane %v38, %v64
    %v66 = vlaneseq
    %v67 = vshrl.u32 %v66, 7
    %v68 = vsub.s32 6, %v67
    %v69 = vrot.slane %v38, %v68
    %v70 = vlaneseq
    %v71 = vshrl.u32 %v70, 7
    %v72 = vsub.s32 7, %v71
    %v73 = vrot.slane %v38, %v72
    %v74 = vcombine.low %v45, %v49
    %v75 = vcombine.low %v53, %v57
    %v77 = vunpack.c.l.s4 1983009808
    %v78 = vunpack.c.0.s8 %v77
    %v79 = vlaneseq
    %v80 = vshrl.u32 %v79, 7
    %v81 = vsub.s32 %v78, %v80
    %v82 = vrot.slane %v74, %v81
    %v84 = vunpack.c.l.s4 1983009808
    %v85 = vunpack.c.0.s8 %v84
    %v86 = vlaneseq
    %v87 = vshrl.u32 %v86, 7
    %v88 = vsub.s32 %v85, %v87
    %v89 = vrot.slane %v75, %v88
    %v90 = vcombine.low %v82, %v89
    %v91 = vcombine.low %v61, %v65
    %v92 = vcombine.low %v69, %v73
    %v94 = vunpack.c.l.s4 1983009808
    %v95 = vunpack.c.0.s8 %v94
    %v96 = vlaneseq
    %v97 = vshrl.u32 %v96, 7
    %v98 = vsub.s32 %v95, %v97
    %v99 = vrot.slane %v91, %v98
    %v101 = vunpack.c.l.s4 1983009808
    %v102 = vunpack.c.0.s8 %v101
    %v103 = vlaneseq
    %v104 = vshrl.u32 %v103, 7
    %v105 = vsub.s32 %v102, %v104
    %v106 = vrot.slane %v92, %v105
    %v107 = vcombine.low %v99, %v106
    %v110 = vsub.f32 %v36, %v90
    %v111 = vsub.f32 %v37, %v107
    %v113 = vlaneseq
    %v114 = vshrl.u32 %v113, 7
    %v115 = vsub.s32 0, %v114
    %v116 = vrot.slane %v40, %v115
    %v117 = vlaneseq
    %v118 = vshrl.u32 %v117, 7
    %v119 = vsub.s32 1, %v118
    %v120 = vrot.slane %v40, %v119
    %v121 = vlaneseq
    %v122 = vshrl.u32 %v121, 7
    %v123 = vsub.s32 2, %v122
    %v124 = vrot.slane %v40, %v123
    %v125 = vlaneseq
    %v126 = vshrl.u32 %v125, 7
    %v127 = vsub.s32 3, %v126
    %v128 = vrot.slane %v40, %v127
    %v129 = vlaneseq
    %v130 = vshrl.u32 %v129, 7
    %v131 = vsub.s32 4, %v130
    %v132 = vrot.slane %v40, %v131
    %v133 = vlaneseq
    %v134 = vshrl.u32 %v133, 7
    %v135 = vsub.s32 5, %v134
    %v136 = vrot.slane %v40, %v135
    %v137 = vlaneseq
    %v138 = vshrl.u32 %v137, 7
    %v139 = vsub.s32 6, %v138
    %v140 = vrot.slane %v40, %v139
    %v141 = vlaneseq
    %v142 = vshrl.u32 %v141, 7
    %v143 = vsub.s32 7, %v142
    %v144 = vrot.slane %v40, %v143
    %v145 = vcombine.low %v116, %v120
    %v146 = vcombine.low %v124, %v128
    %v148 = vunpack.c.l.s4 1983009808
    %v149 = vunpack.c.0.s8 %v148
    %v150 = vlaneseq
    %v151 = vshrl.u32 %v150, 7
    %v152 = vsub.s32 %v149, %v151
    %v153 = vrot.slane %v145, %v152
    %v155 = vunpack.c.l.s4 1983009808
    %v156 = vunpack.c.0.s8 %v155
    %v157 = vlaneseq
    %v158 = vshrl.u32 %v157, 7
    %v159 = vsub.s32 %v156, %v158
    %v160 = vrot.slane %v146, %v159
    %v161 = vcombine.low %v153, %v160
    %v162 = vcombine.low %v132, %v136
    %v163 = vcombine.low %v140, %v144
    %v165 = vunpack.c.l.s4 1983009808
    %v166 = vunpack.c.0.s8 %v165
    %v167 = vlaneseq
    %v168 = vshrl.u32 %v167, 7
    %v169 = vsub.s32 %v166, %v168
    %v170 = vrot.slane %v162, %v169
    %v172 = vunpack.c.l.s4 1983009808
    %v173 = vunpack.c.0.s8 %v172
    %v174 = vlaneseq
    %v175 = vshrl.u32 %v174, 7
    %v176 = vsub.s32 %v173, %v175
    %v177 = vrot.slane %v163, %v176
    %v178 = vcombine.low %v170, %v177
    %v181 = vmul.f32 %v110, %v161
    %v182 = vmul.f32 %v111, %v178
    %v183 = vmax.f32 %v181, 0.0
    %v184 = vmax.f32 %v182, 0.0
    %185 = vst [vmem:[#allocation7] sm:$0xff] %v183
    %186 = vst [vmem:[#allocation7 + $0x8] sm:$0xff] %v184
    // Predicated region
    $region18: #{tpu_custom_call.1} parent=1 // pred_check
      _
    $region19: #{tpu_custom_call.1} parent=1 // pred_check_branch
      %188 = sbr.rel (0) target = $region21
    $region20: #{tpu_custom_call.1} parent=1 // pred_region
      %s190 = ssub.s32 256, 256
      %191 = vsyncadd [#allocation4], %s190
      %s193 = sshll.u32 [#allocation7], 4
      %s194 = int_to_ptr.vmem [resolvable:$true] %s193
      %196 = dma.vmem_to_hbm [thread:$0]  %s194, 256, %s2, [#allocation4]
    $region21: #{tpu_custom_call.1} parent=1 // pred_fallthru
      _
    // Predicated region
    $region22: #{tpu_custom_call.1} parent=1 // pred_check
      _
    $region23: #{tpu_custom_call.1} parent=1 // pred_check_branch
      %198 = sbr.rel (0) target = $region25
    $region24: #{tpu_custom_call.1} parent=1 // pred_region
      %199 = dma.done [#allocation4], 256
    $region25: #{tpu_custom_call.1} parent=1 // pred_fallthru
      _
    %200 = vsyncpa [#allocation3], 1
    %201 = vsyncpa [#allocation6], 1
    %202 = vsyncpa [#allocation4], 1

</llo_original>
